<compile_context>
chip_gen: v5e
topology: v5e:2x2
jax: 0.10.0
libtpu: 0.0.40
codegen_flags: <defaults>
</compile_context>

<pallas_src>
import jax
import jax.numpy as jnp
from jax.experimental import pallas as pl
from jax.experimental.pallas import tpu as pltpu


def _content_loss_kernel(vi_ref, ir_ref, fu_ref, grad_ref, pix_ref, prev_ref):
    t = pl.program_id(1)                      # H-tile index (sequential axis)
    th, w = fu_ref.shape                      # (TILE_H, W), batch dim squeezed

    # ---------------- pixel term: sum((fu - ir)^2) over this tile ----------------
    p = fu_ref[...].astype(jnp.float32) - ir_ref[...].astype(jnp.float32)
    pix_partial = jnp.sum(p * p)

    # ---------------- gradient term on d = fu - vi (laplace is linear) ----------
    n_ev = (th + 1) // 2                      # stride-2 output (center) rows in tile
    n_od = th // 2                            # odd (vertical tap) rows in tile

    # even rows (conv centers) and odd rows (vertical taps), strided sublane loads
    c = (fu_ref[pl.ds(0, n_ev, stride=2), :].astype(jnp.float32)
         - vi_ref[pl.ds(0, n_ev, stride=2), :].astype(jnp.float32))
    od = (fu_ref[pl.ds(1, n_od, stride=2), :].astype(jnp.float32)
          - vi_ref[pl.ds(1, n_od, stride=2), :].astype(jnp.float32))

    # bottom taps: row 2k+1 (zero padding past the image bottom when th is odd)
    if th % 2 == 1:                           # trace-time branch (odd H => single tile)
        b = jnp.concatenate([od, jnp.zeros((1, w), jnp.float32)], axis=0)
    else:
        b = od
    # top taps: row 2k-1 (row -1 of this tile comes from the previous H-tile,
    # zero padding for the very first tile of each image)
    prev = jnp.where(t == 0, jnp.zeros_like(prev_ref[...]), prev_ref[...])
    top = jnp.concatenate([prev, od[: n_ev - 1, :]], axis=0)

    # left / right taps with zero padding at the image borders
    zcol = jnp.zeros((n_ev, 1), jnp.float32)
    left = jnp.concatenate([zcol, c[:, : w - 1]], axis=1)
    right = jnp.concatenate([c[:, 1:], zcol], axis=1)

    lap = 4.0 * c - top - b - left - right    # stride-2 laplacian, all columns

    # keep only even columns (stride-2 in W); mask is a single (1, W) lane vector
    col = jax.lax.broadcasted_iota(jnp.int32, (1, w), 1)
    even_col = (col % 2) == 0
    grad_partial = jnp.sum(jnp.where(even_col, lap * lap, 0.0))

    # carry the last difference row of this tile as the next tile's top halo
    if th % 2 == 0:
        prev_ref[...] = b[n_od - 1:n_od, :]
    else:
        prev_ref[...] = c[n_ev - 1:n_ev, :]

    # per-image accumulators (resident output blocks across the H-tile axis)
    @pl.when(t == 0)
    def _():
        grad_ref[...] = jnp.zeros_like(grad_ref)
        pix_ref[...] = jnp.zeros_like(pix_ref)

    grad_ref[...] += grad_partial
    pix_ref[...] += pix_partial


def _pick_tile_h(h, w, itemsize):
    """Largest H-tile (multiple of 8, dividing H) whose double-buffered inputs
    stay comfortably inside the default scoped VMEM; whole image otherwise."""
    if h % 2 == 1:
        return h                              # odd H -> single tile (kernel pads a row)
    budget = 18 * 1024 * 1024                 # bytes for 3 inputs x 2 pipeline buffers
    per_row = 3 * 2 * w * max(int(itemsize), 4)
    cap = max(8, budget // per_row)
    if h <= cap:
        return h
    start = (min(cap, h) // 8) * 8
    for th in range(int(start), 7, -8):
        if h % th == 0:
            return th
    return h


def content_loss1(img_vi, img_ir, img_fu, _lambda, *, tile_h=None):
    """Pallas equivalent of ContentLoss1.forward. Inputs are NCHW with C==1."""
    n, c, h, w = img_fu.shape
    assert c == 1, "laplace filter is [1,1,3,3] -> single-channel inputs"
    assert img_vi.shape == img_ir.shape == img_fu.shape
    assert h >= 2 and w >= 2

    # squeeze the channel dim (free reshape, no HBM traffic); keep original dtype
    vi = img_vi.reshape(n, h, w)
    ir = img_ir.reshape(n, h, w)
    fu = img_fu.reshape(n, h, w)

    itemsize = jnp.dtype(img_fu.dtype).itemsize
    if tile_h is None:
        tile_h = _pick_tile_h(h, w, itemsize)
    assert h % tile_h == 0
    assert tile_h == h or tile_h % 8 == 0
    n_tiles_h = h // tile_h

    spec_in = pl.BlockSpec((None, tile_h, w), lambda i, t: (i, t, 0))
    spec_out = pl.BlockSpec((1, 8, 128), lambda i, t: (i, 0, 0))

    grad_acc, pix_acc = pl.pallas_call(
        _content_loss_kernel,
        out_shape=(jax.ShapeDtypeStruct((n, 8, 128), jnp.float32),
                   jax.ShapeDtypeStruct((n, 8, 128), jnp.float32)),
        grid=(n, n_tiles_h),
        in_specs=[spec_in, spec_in, spec_in],
        out_specs=(spec_out, spec_out),
        scratch_shapes=[pltpu.VMEM((1, w), jnp.float32)],   # carried top-halo row
        compiler_params=pltpu.CompilerParams(
            dimension_semantics=("parallel", "arbitrary"),
            vmem_limit_bytes=48 * 1024 * 1024),
        cost_estimate=pl.CostEstimate(
            flops=12 * n * h * w,
            transcendentals=0,
            bytes_accessed=3 * n * h * w * int(itemsize) + 2 * n * 8 * 128 * 4),
    )(vi, ir, fu)

    # conv2d output spatial size with k=3, stride=2, padding=1
    h_out = (h - 1) // 2 + 1
    w_out = (w - 1) // 2 + 1

    gradient_loss = jnp.sum(grad_acc[:, 0, 0]) / (n * c * h_out * w_out)
    pixel_loss = jnp.sum(pix_acc[:, 0, 0]) / (n * c * h * w)
    return _lambda * gradient_loss + pixel_loss


def _reference_loss(img_vi, img_ir, img_fu, _lambda):
    """Pure-JAX reference matching F.conv2d semantics (for verification)."""
    lap = jnp.array([[[[0., -1., 0.], [-1., 4., -1.], [0., -1., 0.]]]],
                    dtype=jnp.float32)  # OIHW

    def grad(img):
        return jax.lax.conv_general_dilated(
            img.astype(jnp.float32), lap,
            window_strides=(2, 2), padding=[(1, 1), (1, 1)],
            dimension_numbers=("NCHW", "OIHW", "NCHW"))

    gradient_loss = jnp.mean(jnp.square(grad(img_fu) - grad(img_vi)))
    pixel_loss = jnp.mean(jnp.square(img_fu.astype(jnp.float32)
                                     - img_ir.astype(jnp.float32)))
    return _lambda * gradient_loss + pixel_loss


if __name__ == "__main__":
    _lambda = 5.0

    # Case 1: NCHW single-channel, whole image per grid step.
    key = jax.random.PRNGKey(0)
    k_vi, k_ir, k_fu = jax.random.split(key, 3)
    shape = (2, 1, 16, 16)
    img_vi = jax.random.normal(k_vi, shape, dtype=jnp.float32)
    img_ir = jax.random.normal(k_ir, shape, dtype=jnp.float32)
    img_fu = jax.random.normal(k_fu, shape, dtype=jnp.float32)
    out = jax.block_until_ready(content_loss1(img_vi, img_ir, img_fu, _lambda))
    ref = jax.block_until_ready(_reference_loss(img_vi, img_ir, img_fu, _lambda))
    assert jnp.allclose(out, ref, rtol=1e-5, atol=1e-5), (out, ref)

    # Case 2: forced H-tiling (4 tiles of 8 rows) to exercise the carried halo
    # row and the cross-tile accumulation path.
    shape2 = (2, 1, 32, 16)
    k2_vi, k2_ir, k2_fu = jax.random.split(jax.random.PRNGKey(0), 3)
    vi2 = jax.random.normal(k2_vi, shape2, dtype=jnp.float32)
    ir2 = jax.random.normal(k2_ir, shape2, dtype=jnp.float32)
    fu2 = jax.random.normal(k2_fu, shape2, dtype=jnp.float32)
    out2 = jax.block_until_ready(content_loss1(vi2, ir2, fu2, _lambda, tile_h=8))
    ref2 = jax.block_until_ready(_reference_loss(vi2, ir2, fu2, _lambda))
    assert jnp.allclose(out2, ref2, rtol=1e-5, atol=1e-5), (out2, ref2)

    print("KERNEL_OK")
</pallas_src>

<mosaic_0001>
module attributes {stable_mosaic.version = 11 : i64} {
  func.func @_content_loss_kernel(%arg0: i32, %arg1: i32, %arg2: memref<1x16x16xf32, #tpu.memory_space<vmem>>, %arg3: memref<1x16x16xf32, #tpu.memory_space<vmem>>, %arg4: memref<1x16x16xf32, #tpu.memory_space<vmem>>, %arg5: memref<1x8x128xf32, #tpu.memory_space<vmem>>, %arg6: memref<1x8x128xf32, #tpu.memory_space<vmem>>, %arg7: memref<1x16xf32, #tpu.memory_space<vmem>>) attributes {dimension_semantics = [#tpu.dimension_semantics<parallel>, #tpu.dimension_semantics<arbitrary>], iteration_bounds = array<i64: 2, 1>, scalar_prefetch = 0 : i64, scratch_operands = 1 : i64, tpu.core_type = #tpu.core_type<tc>, window_params = [{transform_indices = @transform_0, window_bounds = array<i64: 1, 16, 16>}, {transform_indices = @transform_1, window_bounds = array<i64: 1, 16, 16>}, {transform_indices = @transform_2, window_bounds = array<i64: 1, 16, 16>}, {transform_indices = @transform_3, window_bounds = array<i64: 1, 8, 128>}, {transform_indices = @transform_4, window_bounds = array<i64: 1, 8, 128>}]} {
    %c0 = arith.constant 0 : index
    %c0_0 = arith.constant 0 : index
    %c0_1 = arith.constant 0 : index
    %0 = vector.load %arg4[%c0, %c0_0, %c0_1] : memref<1x16x16xf32, #tpu.memory_space<vmem>>, vector<1x16x16xf32>
    %1 = vector.shape_cast %0 : vector<1x16x16xf32> to vector<16x16xf32>
    %c0_2 = arith.constant 0 : index
    %c0_3 = arith.constant 0 : index
    %c0_4 = arith.constant 0 : index
    %2 = vector.load %arg3[%c0_2, %c0_3, %c0_4] : memref<1x16x16xf32, #tpu.memory_space<vmem>>, vector<1x16x16xf32>
    %3 = vector.shape_cast %2 : vector<1x16x16xf32> to vector<16x16xf32>
    %4 = arith.subf %1, %3 : vector<16x16xf32>
    %5 = arith.mulf %4, %4 : vector<16x16xf32>
    %6 = vector.shape_cast %5 : vector<16x16xf32> to vector<1x16x16xf32>
    %cst = arith.constant dense<0.000000e+00> : vector<1xf32>
    %7 = vector.multi_reduction <add>, %6, %cst [1, 2] : vector<1x16x16xf32> to vector<1xf32>
    %8 = vector.shape_cast %7 : vector<1xf32> to vector<1x1x1xf32>
    %9 = vector.extract %8[0, 0, 0] : f32 from vector<1x1x1xf32>
    %c0_5 = arith.constant 0 : index
    %c0_6 = arith.constant 0 : index
    %c0_7 = arith.constant 0 : index
    %10 = tpu.strided_load %arg4[%c0_5, %c0_6, %c0_7] {strides = array<i32: 1, 2, 1>} : memref<1x16x16xf32, #tpu.memory_space<vmem>>, vector<1x8x16xf32>
    %11 = vector.shape_cast %10 : vector<1x8x16xf32> to vector<8x16xf32>
    %c0_8 = arith.constant 0 : index
    %c0_9 = arith.constant 0 : index
    %c0_10 = arith.constant 0 : index
    %12 = tpu.strided_load %arg2[%c0_8, %c0_9, %c0_10] {strides = array<i32: 1, 2, 1>} : memref<1x16x16xf32, #tpu.memory_space<vmem>>, vector<1x8x16xf32>
    %13 = vector.shape_cast %12 : vector<1x8x16xf32> to vector<8x16xf32>
    %14 = arith.subf %11, %13 : vector<8x16xf32>
    %c0_11 = arith.constant 0 : index
    %c1 = arith.constant 1 : index
    %c0_12 = arith.constant 0 : index
    %15 = tpu.strided_load %arg4[%c0_11, %c1, %c0_12] {strides = array<i32: 1, 2, 1>} : memref<1x16x16xf32, #tpu.memory_space<vmem>>, vector<1x8x16xf32>
    %16 = vector.shape_cast %15 : vector<1x8x16xf32> to vector<8x16xf32>
    %c0_13 = arith.constant 0 : index
    %c1_14 = arith.constant 1 : index
    %c0_15 = arith.constant 0 : index
    %17 = tpu.strided_load %arg2[%c0_13, %c1_14, %c0_15] {strides = array<i32: 1, 2, 1>} : memref<1x16x16xf32, #tpu.memory_space<vmem>>, vector<1x8x16xf32>
    %18 = vector.shape_cast %17 : vector<1x8x16xf32> to vector<8x16xf32>
    %19 = arith.subf %16, %18 : vector<8x16xf32>
    %c0_i32 = arith.constant 0 : i32
    %20 = arith.cmpi eq, %arg1, %c0_i32 : i32
    %cst_16 = arith.constant 0.000000e+00 : f32
    %21 = vector.broadcast %cst_16 : f32 to vector<1x16xf32>
    %c0_17 = arith.constant 0 : index
    %c0_18 = arith.constant 0 : index
    %22 = vector.load %arg7[%c0_17, %c0_18] : memref<1x16xf32, #tpu.memory_space<vmem>>, vector<1x16xf32>
    %23 = arith.select %20, %21, %22 : vector<1x16xf32>
    %24 = vector.extract_strided_slice %19 {offsets = [0, 0], sizes = [7, 16], strides = [1, 1]} : vector<8x16xf32> to vector<7x16xf32>
    %25 = tpu.concatenate %23, %24 in 0 : vector<1x16xf32>, vector<7x16xf32> -> vector<8x16xf32>
    %cst_19 = arith.constant 0.000000e+00 : f32
    %26 = vector.broadcast %cst_19 : f32 to vector<8x1xf32>
    %27 = vector.extract_strided_slice %14 {offsets = [0, 0], sizes = [8, 15], strides = [1, 1]} : vector<8x16xf32> to vector<8x15xf32>
    %28 = tpu.concatenate %26, %27 in 1 : vector<8x1xf32>, vector<8x15xf32> -> vector<8x16xf32>
    %29 = vector.extract_strided_slice %14 {offsets = [0, 1], sizes = [8, 15], strides = [1, 1]} : vector<8x16xf32> to vector<8x15xf32>
    %30 = tpu.concatenate %29, %26 in 1 : vector<8x15xf32>, vector<8x1xf32> -> vector<8x16xf32>
    %cst_20 = arith.constant 4.000000e+00 : f32
    %31 = vector.broadcast %cst_20 : f32 to vector<8x16xf32>
    %32 = arith.mulf %31, %14 : vector<8x16xf32>
    %33 = arith.subf %32, %25 : vector<8x16xf32>
    %34 = arith.subf %33, %19 : vector<8x16xf32>
    %35 = arith.subf %34, %28 : vector<8x16xf32>
    %36 = arith.subf %35, %30 : vector<8x16xf32>
    %37 = tpu.iota {dimensions = array<i32: 1>} : vector<1x16xi32>
    %c2_i32 = arith.constant 2 : i32
    %c0_i32_21 = arith.constant 0 : i32
    %38 = arith.cmpi eq, %c2_i32, %c0_i32_21 : i32
    %c1_i32 = arith.constant 1 : i32
    %39 = arith.select %38, %c1_i32, %c2_i32 : i32
    %40 = vector.broadcast %39 : i32 to vector<1x16xi32>
    %41 = arith.remsi %37, %40 : vector<1x16xi32>
    %c0_i32_22 = arith.constant 0 : i32
    %42 = vector.broadcast %c0_i32_22 : i32 to vector<1x16xi32>
    %43 = arith.cmpi ne, %41, %42 : vector<1x16xi32>
    %c0_i32_23 = arith.constant 0 : i32
    %44 = vector.broadcast %c0_i32_23 : i32 to vector<1x16xi32>
    %45 = arith.cmpi slt, %41, %44 : vector<1x16xi32>
    %c0_i32_24 = arith.constant 0 : i32
    %46 = arith.cmpi slt, %39, %c0_i32_24 : i32
    %47 = vector.broadcast %46 : i1 to vector<1x16xi1>
    %48 = vector.broadcast %47 : vector<1x16xi1> to vector<1x16xi1>
    %49 = arith.xori %45, %48 : vector<1x16xi1>
    %50 = arith.andi %49, %43 : vector<1x16xi1>
    %51 = vector.broadcast %39 : i32 to vector<1x16xi32>
    %52 = arith.addi %41, %51 : vector<1x16xi32>
    %53 = arith.select %50, %52, %41 : vector<1x16xi1>, vector<1x16xi32>
    %c0_i32_25 = arith.constant 0 : i32
    %54 = vector.broadcast %c0_i32_25 : i32 to vector<1x16xi32>
    %55 = arith.cmpi eq, %53, %54 : vector<1x16xi32>
    %56 = arith.mulf %36, %36 : vector<8x16xf32>
    %cst_26 = arith.constant 0.000000e+00 : f32
    %57 = vector.shape_cast %55 : vector<1x16xi1> to vector<1x16xi1>
    %58 = vector.broadcast %57 : vector<1x16xi1> to vector<8x16xi1>
    %59 = vector.broadcast %cst_26 : f32 to vector<8x16xf32>
    %60 = arith.select %58, %56, %59 : vector<8x16xi1>, vector<8x16xf32>
    %61 = vector.shape_cast %60 : vector<8x16xf32> to vector<1x8x16xf32>
    %cst_27 = arith.constant dense<0.000000e+00> : vector<1xf32>
    %62 = vector.multi_reduction <add>, %61, %cst_27 [1, 2] : vector<1x8x16xf32> to vector<1xf32>
    %63 = vector.shape_cast %62 : vector<1xf32> to vector<1x1x1xf32>
    %64 = vector.extract %63[0, 0, 0] : f32 from vector<1x1x1xf32>
    %65 = vector.extract_strided_slice %19 {offsets = [7, 0], sizes = [1, 16], strides = [1, 1]} : vector<8x16xf32> to vector<1x16xf32>
    %c0_28 = arith.constant 0 : index
    %c0_29 = arith.constant 0 : index
    %66 = vector.load %arg7[%c0_28, %c0_29] : memref<1x16xf32, #tpu.memory_space<vmem>>, vector<1x16xf32>
    tpu.vector_store %arg7[%c0_28, %c0_29], %65 {strides = array<i32>} : memref<1x16xf32, #tpu.memory_space<vmem>>, vector<1x16xf32>,
    %c0_i32_30 = arith.constant 0 : i32
    %67 = arith.cmpi eq, %arg1, %c0_i32_30 : i32
    %68 = arith.extui %67 : i1 to i32
    %c0_i32_31 = arith.constant 0 : i32
    %69 = arith.cmpi ne, %68, %c0_i32_31 : i32
    scf.if %69 {
      %cst_44 = arith.constant 0.000000e+00 : f32
      %78 = vector.broadcast %cst_44 : f32 to vector<1x8x128xf32>
      %c0_45 = arith.constant 0 : index
      %c0_46 = arith.constant 0 : index
      %c0_47 = arith.constant 0 : index
      %79 = vector.load %arg5[%c0_45, %c0_46, %c0_47] : memref<1x8x128xf32, #tpu.memory_space<vmem>>, vector<1x8x128xf32>
      tpu.vector_store %arg5[%c0_45, %c0_46, %c0_47], %78 {strides = array<i32>} : memref<1x8x128xf32, #tpu.memory_space<vmem>>, vector<1x8x128xf32>,
      %cst_48 = arith.constant 0.000000e+00 : f32
      %80 = vector.broadcast %cst_48 : f32 to vector<1x8x128xf32>
      %c0_49 = arith.constant 0 : index
      %c0_50 = arith.constant 0 : index
      %c0_51 = arith.constant 0 : index
      %81 = vector.load %arg6[%c0_49, %c0_50, %c0_51] : memref<1x8x128xf32, #tpu.memory_space<vmem>>, vector<1x8x128xf32>
      tpu.vector_store %arg6[%c0_49, %c0_50, %c0_51], %80 {strides = array<i32>} : memref<1x8x128xf32, #tpu.memory_space<vmem>>, vector<1x8x128xf32>,
    } else {
    }
    %c0_32 = arith.constant 0 : index
    %c0_33 = arith.constant 0 : index
    %c0_34 = arith.constant 0 : index
    %70 = vector.load %arg5[%c0_32, %c0_33, %c0_34] : memref<1x8x128xf32, #tpu.memory_space<vmem>>, vector<1x8x128xf32>
    %71 = vector.broadcast %64 : f32 to vector<1x8x128xf32>
    %72 = arith.addf %70, %71 : vector<1x8x128xf32>
    %c0_35 = arith.constant 0 : index
    %c0_36 = arith.constant 0 : index
    %c0_37 = arith.constant 0 : index
    %73 = vector.load %arg5[%c0_35, %c0_36, %c0_37] : memref<1x8x128xf32, #tpu.memory_space<vmem>>, vector<1x8x128xf32>
    tpu.vector_store %arg5[%c0_35, %c0_36, %c0_37], %72 {strides = array<i32>} : memref<1x8x128xf32, #tpu.memory_space<vmem>>, vector<1x8x128xf32>,
    %c0_38 = arith.constant 0 : index
    %c0_39 = arith.constant 0 : index
    %c0_40 = arith.constant 0 : index
    %74 = vector.load %arg6[%c0_38, %c0_39, %c0_40] : memref<1x8x128xf32, #tpu.memory_space<vmem>>, vector<1x8x128xf32>
    %75 = vector.broadcast %9 : f32 to vector<1x8x128xf32>
    %76 = arith.addf %74, %75 : vector<1x8x128xf32>
    %c0_41 = arith.constant 0 : index
    %c0_42 = arith.constant 0 : index
    %c0_43 = arith.constant 0 : index
    %77 = vector.load %arg6[%c0_41, %c0_42, %c0_43] : memref<1x8x128xf32, #tpu.memory_space<vmem>>, vector<1x8x128xf32>
    tpu.vector_store %arg6[%c0_41, %c0_42, %c0_43], %76 {strides = array<i32>} : memref<1x8x128xf32, #tpu.memory_space<vmem>>, vector<1x8x128xf32>,
    return
  }
  func.func @transform_0(%arg0: i32, %arg1: i32) -> (i32, i32, i32) {
    %c0_i32 = arith.constant 0 : i32
    %c0_i32_0 = arith.constant 0 : i32
    return %arg0, %arg1, %c0_i32 : i32, i32, i32
  }
  func.func @transform_1(%arg0: i32, %arg1: i32) -> (i32, i32, i32) {
    %c0_i32 = arith.constant 0 : i32
    %c0_i32_0 = arith.constant 0 : i32
    return %arg0, %arg1, %c0_i32 : i32, i32, i32
  }
  func.func @transform_2(%arg0: i32, %arg1: i32) -> (i32, i32, i32) {
    %c0_i32 = arith.constant 0 : i32
    %c0_i32_0 = arith.constant 0 : i32
    return %arg0, %arg1, %c0_i32 : i32, i32, i32
  }
  func.func @transform_3(%arg0: i32, %arg1: i32) -> (i32, i32, i32) {
    %c0_i32 = arith.constant 0 : i32
    %c0_i32_0 = arith.constant 0 : i32
    %c0_i32_1 = arith.constant 0 : i32
    return %arg0, %c0_i32, %c0_i32_0 : i32, i32, i32
  }
  func.func @transform_4(%arg0: i32, %arg1: i32) -> (i32, i32, i32) {
    %c0_i32 = arith.constant 0 : i32
    %c0_i32_0 = arith.constant 0 : i32
    %c0_i32_1 = arith.constant 0 : i32
    return %arg0, %c0_i32, %c0_i32_0 : i32, i32, i32
  }
}

</mosaic_0001>

<llo_original>
// kernel: tpu_custom_call.1
$region0: #{tpu_custom_call.1}
  #allocation0 [shape = 'u32[]', space=smem, size = 0x4, offset = 0x4, fixed_abs, tag = 'smem constant byte address 0x4 - core index']
  #allocation1 [shape = 'u32[72,128]{1,0:T(1,128)}', space=vmem, size = 0x9000, scoped, tag = 'internal scratch']
  #allocation2 [shape = 'f32[1,16]{1,0:T(1,128)}', space=vmem, size = 0x200, scoped, tag = 'scratch operand']
  %s0 = inlined_call_operand.hbm [shape: f32[2,16,16], index: 0, kind: input, shape index: {}]
  %s1 = inlined_call_operand.hbm [shape: f32[2,16,16], index: 1, kind: input, shape index: {}]
  %s2 = inlined_call_operand.hbm [shape: f32[2,16,16], index: 2, kind: input, shape index: {}]
  %s3 = inlined_call_operand.hbm [shape: f32[2,8,128], index: 3, kind: output, shape index: {0}]
  %s4 = inlined_call_operand.hbm [shape: f32[2,8,128], index: 4, kind: output, shape index: {1}]
  %5 = xla_tuple %s3, %s4
  %s6 = sld [smem:[#allocation0]]
  $region69: #{tpu_custom_call.1} parent=0
    _
  %s8 = ssub.s32 1, %s6
  %s9 = scalar_select 0, %s8, %s6
  $region1: #{tpu_custom_call.1} parent=0
    #allocation3 [shape = 'u8[16384]{0}', space=vmem, size = 0x4000, scoped, tag = 'input window, operand 0']
    #allocation4 [shape = 's32[2]{0}', space=sflag, size = 0x8, scoped, tag = 'scoped memory for tpu_custom_call.1']
    #allocation5 [shape = 's32[2]{0}', space=sflag, size = 0x8, scoped, tag = 'scoped memory for tpu_custom_call.1']
    #allocation6 [shape = 'u8[16384]{0}', space=vmem, size = 0x4000, scoped, tag = 'input window, operand 1']
    #allocation7 [shape = 's32[2]{0}', space=sflag, size = 0x8, scoped, tag = 'scoped memory for tpu_custom_call.1']
    #allocation8 [shape = 'u8[16384]{0}', space=vmem, size = 0x4000, scoped, tag = 'input window, operand 2']
    #allocation9 [shape = 'u8[8192]{0}', space=vmem, size = 0x2000, scoped, tag = 'output window, operand 0']
    #allocation10 [shape = 'u8[8192]{0}', space=vmem, size = 0x2000, scoped, tag = 'output window, operand 1']
    #allocation11 [shape = 's32[2]{0}', space=sflag, size = 0x8, scoped, tag = 'scoped memory for tpu_custom_call.1']
    %10 = vsyncpa [#allocation4], 0
    %s11 = scalar_lea.sflag [#allocation4], 1
    %12 = vsyncpa %s11, 0
    %13 = vsyncpa [#allocation7], 0
    %s14 = scalar_lea.sflag [#allocation7], 1
    %15 = vsyncpa %s14, 0
    %16 = vsyncpa [#allocation5], 0
    %s17 = scalar_lea.sflag [#allocation5], 1
    %18 = vsyncpa %s17, 0
    %19 = vsyncpa [#allocation11], 0
    %s20 = scalar_lea.sflag [#allocation11], 1
    %21 = vsyncpa %s20, 0
    loop: start=0, step=1, limit=4
    $region2: #{tpu_custom_call.1} parent=1 // loop_pre_header
      _
    $region3: #{tpu_custom_call.1} parent=1 // loop_header
      %s23 = sphi 0, %s27
      %p24 = scmp.ge.s32.totalorder %s23, 4
      %s30 = sphi 0, %s42
      %s31 = sphi 0, %s38
      %s32 = sphi 0, %s30
      %s33 = sphi 0, %s31
      %s34 = sphi 0, %s32
      %s35 = sphi 0, %s33
      %s47 = sphi 0, %s49
      %s50 = sphi 0, %s47
      %s51 = sphi 0, %s50
      %s67 = sphi 0, %s51
      %s75 = sphi 0, %s77
      %s78 = sphi 0, %s75
      %s79 = sphi 0, %s78
      %s95 = sphi 0, %s79
      %s103 = sphi 0, %s105
      %s106 = sphi 0, %s103
      %s107 = sphi 0, %s106
      %s123 = sphi 0, %s107
      %s129 = sphi 0, %s131
      %s132 = sphi 0, %s129
      %s133 = sphi 0, %s132
      %s149 = sphi 0, %s133
      %s155 = sphi 0, %s157
      %s158 = sphi 0, %s155
      %s159 = sphi 0, %s158
      %s175 = sphi 0, %s159
    $region4: #{tpu_custom_call.1} parent=1 // loop_header_branch
      %26 = sbr.rel (%p24) target = $region8
    $region5: #{tpu_custom_call.1} parent=1 // loop_body
      %s28 = ssub.s32 %s23, 1
      %s29 = ssub.s32 %s23, 2
      %s36 = sadd.s32 1, %s31
      %p37 = scmp.ge.s32.totalorder %s36, 1
      %s38 = scalar_select %p37, 0, %s36
      %s39 = sadd.s32 1, %s30
      %s40 = scalar_select %p37, %s39, %s30
      %p41 = scmp.ge.s32.totalorder %s40, 2
      %s42 = scalar_select %p41, 0, %s40
      %s43 = ssub.s32 %s30, %s42
      %s44 = ssub.s32 %s31, %s38
      %s45 = sor.u32 %s43, %s44
      %p46 = scmp.eq.s32.totalorder %s45, 0
      %s48 = sadd.s32 %s47, 1
      %s49 = scalar_select %p46, %s47, %s48
      %p52 = pneg %p46
      %p53 = scmp.eq.s32.totalorder %s23, 1
      %p54 = por %p52, %p53
      %p55 = scmp.ne.s32.totalorder %s47, %s50
      %p56 = scmp.eq.s32.totalorder %s23, 0
      %p57 = por %p55, %p56
      %p58 = scmp.ne.s32.totalorder %s47, %s50
      %p59 = scmp.eq.s32.totalorder %s28, 1
      %p60 = por %p58, %p59
      %p61 = scmp.ne.s32.totalorder %s50, %s51
      %p62 = scmp.eq.s32.totalorder %s28, 0
      %p63 = por %p61, %p62
      %p64 = scmp.ne.s32.totalorder %s50, %s51
      %p65 = scmp.eq.s32.totalorder %s29, 1
      %p66 = por %p64, %p65
      %p68 = scmp.ne.s32.totalorder %s51, %s67
      %p69 = scmp.eq.s32.totalorder %s29, 0
      %p70 = por %p68, %p69
      %s71 = ssub.s32 %s30, %s42
      %s72 = ssub.s32 %s31, %s38
      %s73 = sor.u32 %s71, %s72
      %p74 = scmp.eq.s32.totalorder %s73, 0
      %s76 = sadd.s32 %s75, 1
      %s77 = scalar_select %p74, %s75, %s76
      %p80 = pneg %p74
      %p81 = scmp.eq.s32.totalorder %s23, 1
      %p82 = por %p80, %p81
      %p83 = scmp.ne.s32.totalorder %s75, %s78
      %p84 = scmp.eq.s32.totalorder %s23, 0
      %p85 = por %p83, %p84
      %p86 = scmp.ne.s32.totalorder %s75, %s78
      %p87 = scmp.eq.s32.totalorder %s28, 1
      %p88 = por %p86, %p87
      %p89 = scmp.ne.s32.totalorder %s78, %s79
      %p90 = scmp.eq.s32.totalorder %s28, 0
      %p91 = por %p89, %p90
      %p92 = scmp.ne.s32.totalorder %s78, %s79
      %p93 = scmp.eq.s32.totalorder %s29, 1
      %p94 = por %p92, %p93
      %p96 = scmp.ne.s32.totalorder %s79, %s95
      %p97 = scmp.eq.s32.totalorder %s29, 0
      %p98 = por %p96, %p97
      %s99 = ssub.s32 %s30, %s42
      %s100 = ssub.s32 %s31, %s38
      %s101 = sor.u32 %s99, %s100
      %p102 = scmp.eq.s32.totalorder %s101, 0
      %s104 = sadd.s32 %s103, 1
      %s105 = scalar_select %p102, %s103, %s104
      %p108 = pneg %p102
      %p109 = scmp.eq.s32.totalorder %s23, 1
      %p110 = por %p108, %p109
      %p111 = scmp.ne.s32.totalorder %s103, %s106
      %p112 = scmp.eq.s32.totalorder %s23, 0
      %p113 = por %p111, %p112
      %p114 = scmp.ne.s32.totalorder %s103, %s106
      %p115 = scmp.eq.s32.totalorder %s28, 1
      %p116 = por %p114, %p115
      %p117 = scmp.ne.s32.totalorder %s106, %s107
      %p118 = scmp.eq.s32.totalorder %s28, 0
      %p119 = por %p117, %p118
      %p120 = scmp.ne.s32.totalorder %s106, %s107
      %p121 = scmp.eq.s32.totalorder %s29, 1
      %p122 = por %p120, %p121
      %p124 = scmp.ne.s32.totalorder %s107, %s123
      %p125 = scmp.eq.s32.totalorder %s29, 0
      %p126 = por %p124, %p125
      %s127 = ssub.s32 %s30, %s42
      %p128 = scmp.eq.s32.totalorder %s127, 0
      %s130 = sadd.s32 %s129, 1
      %s131 = scalar_select %p128, %s129, %s130
      %p134 = pneg %p128
      %p135 = scmp.eq.s32.totalorder %s23, 1
      %p136 = por %p134, %p135
      %p137 = scmp.ne.s32.totalorder %s129, %s132
      %p138 = scmp.eq.s32.totalorder %s23, 0
      %p139 = por %p137, %p138
      %p140 = scmp.ne.s32.totalorder %s129, %s132
      %p141 = scmp.eq.s32.totalorder %s28, 1
      %p142 = por %p140, %p141
      %p143 = scmp.ne.s32.totalorder %s132, %s133
      %p144 = scmp.eq.s32.totalorder %s28, 0
      %p145 = por %p143, %p144
      %p146 = scmp.ne.s32.totalorder %s132, %s133
      %p147 = scmp.eq.s32.totalorder %s29, 1
      %p148 = por %p146, %p147
      %p150 = scmp.ne.s32.totalorder %s133, %s149
      %p151 = scmp.eq.s32.totalorder %s29, 0
      %p152 = por %p150, %p151
      %s153 = ssub.s32 %s30, %s42
      %p154 = scmp.eq.s32.totalorder %s153, 0
      %s156 = sadd.s32 %s155, 1
      %s157 = scalar_select %p154, %s155, %s156
      %p160 = pneg %p154
      %p161 = scmp.eq.s32.totalorder %s23, 1
      %p162 = por %p160, %p161
      %p163 = scmp.ne.s32.totalorder %s155, %s158
      %p164 = scmp.eq.s32.totalorder %s23, 0
      %p165 = por %p163, %p164
      %p166 = scmp.ne.s32.totalorder %s155, %s158
      %p167 = scmp.eq.s32.totalorder %s28, 1
      %p168 = por %p166, %p167
      %p169 = scmp.ne.s32.totalorder %s158, %s159
      %p170 = scmp.eq.s32.totalorder %s28, 0
      %p171 = por %p169, %p170
      %p172 = scmp.ne.s32.totalorder %s158, %s159
      %p173 = scmp.eq.s32.totalorder %s29, 1
      %p174 = por %p172, %p173
      %p176 = scmp.ne.s32.totalorder %s159, %s175
      %p177 = scmp.eq.s32.totalorder %s29, 0
      %p178 = por %p176, %p177
      %p179 = scmp.le.s32.totalorder 1, %s23
      %p180 = scmp.lt.s32.totalorder %s23, 3
      %p181 = pnand %p179, %p180
      %p182 = pneg %p181
      // Predicated region
      $region9: #{tpu_custom_call.1} parent=5 // pred_check
        _
      $region10: #{tpu_custom_call.1} parent=5 // pred_check_branch
        %184 = sbr.rel (%p181) target = $region12
      $region11: #{tpu_custom_call.1} parent=5 // pred_region
        %s185 = ssub.s32 %s23, 1
      $region12: #{tpu_custom_call.1} parent=5 // pred_fallthru
        _
      %p186 = scmp.lt.s32.totalorder %s23, 2
      // Predicated region
      $region13: #{tpu_custom_call.1} parent=5 // pred_check
        %p187 = pneg %p186
      $region14: #{tpu_custom_call.1} parent=5 // pred_check_branch
        %189 = sbr.rel (%p187) target = $region16
      $region15: #{tpu_custom_call.1} parent=5 // pred_region
        // Predicated region
        $region17: #{tpu_custom_call.1} parent=15 // pred_check
          %p190 = pneg %p57
        $region18: #{tpu_custom_call.1} parent=15 // pred_check_branch
          %192 = sbr.rel (%p190) target = $region20
        $region19: #{tpu_custom_call.1} parent=15 // pred_region
          %s193 = sand.u32 %s47, 1
          %s194 = scalar_lea.sflag [#allocation4], %s193
          %s195 = sand.u32 %s47, 1
          %s196 = smul.addr %s195, 16
          %s197 = scalar_lea.vmem [#allocation3], %s196
          %s198 = smul.u32 2, %s31
          %200 = vsyncadd %s194, 0
          %s201 = smul.addr %s30, 2
          %s202 = sadd.s32 %s198, %s201
          %s203 = smul.addr %s202, 8
          %s204 = scalar_lea.hbm %s0, %s203
          %s205 = sshll.u32 %s204, 4
          %s206 = int_to_ptr.hbm [resolvable:$true] %s205
          %s207 = sshll.u32 %s197, 4
          %s208 = int_to_ptr.vmem [resolvable:$true] %s207
          %213 = dma.hbm_to_vmem [thread:$0]  %s206, 256, %s208, %s194, 128, 128, 8
        $region20: #{tpu_custom_call.1} parent=15 // pred_fallthru
          _
        // Predicated region
        $region21: #{tpu_custom_call.1} parent=15 // pred_check
          %p214 = pneg %p85
        $region22: #{tpu_custom_call.1} parent=15 // pred_check_branch
          %216 = sbr.rel (%p214) target = $region24
        $region23: #{tpu_custom_call.1} parent=15 // pred_region
          %s217 = sand.u32 %s23, 1
          %s218 = scalar_lea.sflag [#allocation7], %s217
          %s219 = sand.u32 %s75, 1
          %s220 = smul.addr %s219, 16
          %s221 = scalar_lea.vmem [#allocation6], %s220
          %s222 = smul.u32 2, %s31
          %224 = vsyncadd %s218, 0
          %s225 = smul.addr %s30, 2
          %s226 = sadd.s32 %s222, %s225
          %s227 = smul.addr %s226, 8
          %s228 = scalar_lea.hbm %s1, %s227
          %s229 = sshll.u32 %s228, 4
          %s230 = int_to_ptr.hbm [resolvable:$true] %s229
          %s231 = sshll.u32 %s221, 4
          %s232 = int_to_ptr.vmem [resolvable:$true] %s231
          %237 = dma.hbm_to_vmem [thread:$0]  %s230, 256, %s232, %s218, 128, 128, 8
        $region24: #{tpu_custom_call.1} parent=15 // pred_fallthru
          _
        // Predicated region
        $region25: #{tpu_custom_call.1} parent=15 // pred_check
          %p238 = pneg %p113
        $region26: #{tpu_custom_call.1} parent=15 // pred_check_branch
          %240 = sbr.rel (%p238) target = $region28
        $region27: #{tpu_custom_call.1} parent=15 // pred_region
          %s241 = sand.u32 %s23, 1
          %s242 = scalar_lea.sflag [#allocation7], %s241
          %s243 = sand.u32 %s103, 1
          %s244 = smul.addr %s243, 16
          %s245 = scalar_lea.vmem [#allocation8], %s244
          %s246 = smul.u32 2, %s31
          %248 = vsyncadd %s242, 0
          %s249 = smul.addr %s30, 2
          %s250 = sadd.s32 %s246, %s249
          %s251 = smul.addr %s250, 8
          %s252 = scalar_lea.hbm %s2, %s251
          %s253 = sshll.u32 %s252, 4
          %s254 = int_to_ptr.hbm [resolvable:$true] %s253
          %s255 = sshll.u32 %s245, 4
          %s256 = int_to_ptr.vmem [resolvable:$true] %s255
          %261 = dma.hbm_to_vmem [thread:$0]  %s254, 256, %s256, %s242, 128, 128, 8
        $region28: #{tpu_custom_call.1} parent=15 // pred_fallthru
          _
      $region16: #{tpu_custom_call.1} parent=5 // pred_fallthru
        _
      %p262 = scmp.le.s32.totalorder 1, %s23
      %p263 = scmp.lt.s32.totalorder %s23, 3
      %p264 = pnand %p262, %p263
      %p265 = pneg %p264
      // Predicated region
      $region29: #{tpu_custom_call.1} parent=5 // pred_check
        _
      $region30: #{tpu_custom_call.1} parent=5 // pred_check_branch
        %267 = sbr.rel (%p264) target = $region32
      $region31: #{tpu_custom_call.1} parent=5 // pred_region
        %s268 = ssub.s32 %s23, 1
        %s269 = sand.u32 %s50, 1
        %s270 = scalar_lea.sflag [#allocation4], %s269
        %s271 = sand.u32 %s50, 1
        %s272 = smul.addr %s271, 16
        %s273 = scalar_lea.vmem [#allocation3], %s272
        // Predicated region
        $region33: #{tpu_custom_call.1} parent=31 // pred_check
          %p274 = pneg %p63
        $region34: #{tpu_custom_call.1} parent=31 // pred_check_branch
          %276 = sbr.rel (%p274) target = $region36
        $region35: #{tpu_custom_call.1} parent=31 // pred_region
          %278 = dma.done %s270, 256
        $region36: #{tpu_custom_call.1} parent=31 // pred_fallthru
          _
        %s279 = sand.u32 %s28, 1
        %s280 = scalar_lea.sflag [#allocation7], %s279
        %s281 = sand.u32 %s78, 1
        %s282 = smul.addr %s281, 16
        %s283 = scalar_lea.vmem [#allocation6], %s282
        // Predicated region
        $region37: #{tpu_custom_call.1} parent=31 // pred_check
          %p284 = pneg %p91
        $region38: #{tpu_custom_call.1} parent=31 // pred_check_branch
          %286 = sbr.rel (%p284) target = $region40
        $region39: #{tpu_custom_call.1} parent=31 // pred_region
          %288 = dma.done %s280, 256
        $region40: #{tpu_custom_call.1} parent=31 // pred_fallthru
          _
        %s289 = sand.u32 %s28, 1
        %s290 = scalar_lea.sflag [#allocation7], %s289
        %s291 = sand.u32 %s106, 1
        %s292 = smul.addr %s291, 16
        %s293 = scalar_lea.vmem [#allocation8], %s292
        // Predicated region
        $region41: #{tpu_custom_call.1} parent=31 // pred_check
          %p294 = pneg %p119
        $region42: #{tpu_custom_call.1} parent=31 // pred_check_branch
          %296 = sbr.rel (%p294) target = $region44
        $region43: #{tpu_custom_call.1} parent=31 // pred_region
          %298 = dma.done %s290, 256
        $region44: #{tpu_custom_call.1} parent=31 // pred_fallthru
          _
        %s299 = sand.u32 %s50, 1
        %s300 = scalar_lea.sflag [#allocation4], %s299
        %s301 = sand.u32 %s50, 1
        %s302 = smul.addr %s301, 16
        %s303 = scalar_lea.vmem [#allocation3], %s302
        %p304 = pneg %p63
        %p305 = pneg %p60
        %s306 = sand.u32 %s28, 1
        %s307 = scalar_lea.sflag [#allocation7], %s306
        %s308 = sand.u32 %s78, 1
        %s309 = smul.addr %s308, 16
        %s310 = scalar_lea.vmem [#allocation6], %s309
        %p311 = pneg %p91
        %p312 = pneg %p88
        %s313 = sand.u32 %s28, 1
        %s314 = scalar_lea.sflag [#allocation7], %s313
        %s315 = sand.u32 %s106, 1
        %s316 = smul.addr %s315, 16
        %s317 = scalar_lea.vmem [#allocation8], %s316
        %p318 = pneg %p119
        %p319 = pneg %p116
        %p320 = pneg %p145
        %p321 = pneg %p142
        %s322 = sand.u32 %s132, 1
        %s323 = scalar_lea.sflag [#allocation5], %s322
        %s324 = sand.u32 %s132, 1
        %s325 = smul.addr %s324, 8
        %s326 = scalar_lea.vmem [#allocation9], %s325
        %p327 = pneg %p171
        %p328 = pneg %p168
        %s329 = sand.u32 %s158, 1
        %s330 = scalar_lea.sflag [#allocation11], %s329
        %s331 = sand.u32 %s158, 1
        %s332 = smul.addr %s331, 8
        %s333 = scalar_lea.vmem [#allocation10], %s332
        %s334 = smul.u32 2, %s33
        %s335 = smul.u32 2, %s33
        %s336 = smul.u32 2, %s33
        %v337 = vld [vmem:[%s293] sm:$0xff]
        %v338 = vld [vmem:[%s293 + $0x8] sm:$0xff]
        %v339 = vld [vmem:[%s283] sm:$0xff]
        %v340 = vld [vmem:[%s283 + $0x8] sm:$0xff]
        %v341 = vsub.f32 %v337, %v339
        %v342 = vsub.f32 %v338, %v340
        %v343 = vmul.f32 %v341, %v341
        %v344 = vmul.f32 %v342, %v342
        %vm345 = vcmask 130048
        %v346 = vsel %vm345, %v343, 0.0
        %v347 = vsel %vm345, %v344, 0.0
        %v348 = vadd.f32 %v346, %v347
        %349 = vadd.xlane.f32.xlu0 %v348
        %v350 = vpop.xlane.xlu0 %349
        %v351 = vrot.slane %v350, 4
        %v352 = vadd.f32 %v350, %v351
        %v353 = vrot.slane %v352, 2
        %v354 = vadd.f32 %v352, %v353
        %v355 = vrot.slane %v354, 1
        %v356 = vadd.f32 %v354, %v355
        %s357 = vtos %v356
        %v358 = vld [vmem:[%s293] ss:$2 sm:$0xff]
        %v359 = vld [vmem:[%s273] ss:$2 sm:$0xff]
        %v360 = vsub.f32 %v358, %v359
        %s361 = scalar_lea.vmem %s293, 1 [#allocation8]
        %v362 = vld [vmem:[%s361] ss:$2 sm:$0xff]
        %s363 = scalar_lea.vmem %s273, 1 [#allocation3]
        %v364 = vld [vmem:[%s363] ss:$2 sm:$0xff]
        %v365 = vsub.f32 %v362, %v364
        %p366 = scmp.eq.s32.totalorder %s33, 0
        %v367 = vld [vmem:[#allocation2] sm:$0x1]
        %s368 = scalar_select %p366, 1, 0
        %v369 = vstv %s368
        %vm370 = vcmp.eq.s32.totalorder %v369, 1
        %v371 = vsel %vm370, 0.0, %v367
        %v373 = vrot.slane %v365, 7
        %vm375 = vcmask 1040384
        %v376 = vsel %vm375, %v371, %v373
        %378 = vrot.lane.b32.xlu0 %v360, 1
        %v379 = vpop.permute.xlu0 %378
        %vm381 = vcmask 7168
        %v382 = vsel %vm381, 0.0, %v379
        %383 = vrot.lane.b32.xlu0 %v360, 127
        %v384 = vpop.permute.xlu0 %383
        %vm386 = vcmask 121856
        %v387 = vsel %vm386, %v384, 0.0
        %v388 = vmul.f32 %v360, 4.0
        %v389 = vsub.f32 %v388, %v376
        %v390 = vsub.f32 %v389, %v365
        %v391 = vsub.f32 %v390, %v382
        %v392 = vsub.f32 %v391, %v387
        %v393 = vlaneseq
        %v394 = vand.u32 %v393, 127
        %vm395 = vcmp.lt.s32.totalorder %v394, 0
        %v396 = vsub.s32 0, %v394
        %v397 = vsel %vm395, %v396, %v394
        %v398 = vshrl.u32 %v397, 1
        %v399 = vand.u32 %v397, 1
        %v400 = vsub.s32 0, %v399
        %v401 = vsel %vm395, %v400, %v399
        %vm402 = vcmp.ne.s32.totalorder %v401, 0
        %vm403 = vcmp.lt.s32.totalorder %v401, 0
        %vm404 = vmand %vm403, %vm402
        %v405 = vadd.s32 %v401, 2
        %v406 = vsel %vm404, %v405, %v401
        %vm407 = vcmp.eq.s32.totalorder %v406, 0
        %v408 = vmul.f32 %v392, %v392
        %v409 = vsel %vm407, 1, 0
        %vm410 = vcmp.eq.s32.totalorder %v409, 1
        %v411 = vsel %vm410, %v408, 0.0
        %v412 = vsel %vm345, %v411, 0.0
        %413 = vadd.xlane.f32.xlu0 %v412
        %v414 = vpop.xlane.xlu0 %413
        %v415 = vrot.slane %v414, 4
        %v416 = vadd.f32 %v414, %v415
        %v417 = vrot.slane %v416, 2
        %v418 = vadd.f32 %v416, %v417
        %v419 = vrot.slane %v418, 1
        %v420 = vadd.f32 %v418, %v419
        %s421 = vtos %v420
        %vm422 = vcmask 130055
        %423 = vst.msk [vmem:[#allocation2 - $0x7] sm:$0x80] %vm422, %v365
        // Predicated region
        $region45: #{tpu_custom_call.1} parent=31 // pred_check
          %p424 = pneg %p366
        $region46: #{tpu_custom_call.1} parent=31 // pred_check_branch
          %426 = sbr.rel (%p424) target = $region48
        $region47: #{tpu_custom_call.1} parent=31 // pred_region
          %427 = vst [vmem:[%s326] sm:$0xff] 0.0
          %428 = vst [vmem:[%s333] sm:$0xff] 0.0
        $region48: #{tpu_custom_call.1} parent=31 // pred_fallthru
          _
        %v429 = vld [vmem:[%s326] sm:$0xff]
        %v430 = vstv %s421
        %v431 = vadd.f32 %v429, %v430
        %432 = vst [vmem:[%s326] sm:$0xff] %v431
        %v433 = vld [vmem:[%s333] sm:$0xff]
        %v434 = vstv %s357
        %v435 = vadd.f32 %v433, %v434
        %436 = vst [vmem:[%s333] sm:$0xff] %v435
        %s437 = sand.u32 %s132, 1
        %s438 = scalar_lea.sflag [#allocation5], %s437
        %s439 = sand.u32 %s132, 1
        %s440 = smul.addr %s439, 8
        %s441 = scalar_lea.vmem [#allocation9], %s440
        %s442 = sand.u32 %s158, 1
        %s443 = scalar_lea.sflag [#allocation11], %s442
        %s444 = sand.u32 %s158, 1
        %s445 = smul.addr %s444, 8
        %s446 = scalar_lea.vmem [#allocation10], %s445
        // Predicated region
        $region49: #{tpu_custom_call.1} parent=31 // pred_check
          %p447 = pneg %p142
        $region50: #{tpu_custom_call.1} parent=31 // pred_check_branch
          %449 = sbr.rel (%p447) target = $region52
        $region51: #{tpu_custom_call.1} parent=31 // pred_region
          %451 = vsyncadd %s438, 0
          %s452 = smul.addr %s32, 8
          %s453 = scalar_lea.hbm %s3, %s452
          %s455 = sshll.u32 %s441, 4
          %s456 = int_to_ptr.vmem [resolvable:$true] %s455
          %s457 = sshll.u32 %s453, 4
          %s458 = int_to_ptr.hbm [resolvable:$true] %s457
          %460 = dma.vmem_to_hbm [thread:$0]  %s456, 128, %s458, %s438
        $region52: #{tpu_custom_call.1} parent=31 // pred_fallthru
          _
        // Predicated region
        $region53: #{tpu_custom_call.1} parent=31 // pred_check
          %p461 = pneg %p168
        $region54: #{tpu_custom_call.1} parent=31 // pred_check_branch
          %463 = sbr.rel (%p461) target = $region56
        $region55: #{tpu_custom_call.1} parent=31 // pred_region
          %465 = vsyncadd %s443, 0
          %s466 = smul.addr %s32, 8
          %s467 = scalar_lea.hbm %s4, %s466
          %s469 = sshll.u32 %s446, 4
          %s470 = int_to_ptr.vmem [resolvable:$true] %s469
          %s471 = sshll.u32 %s467, 4
          %s472 = int_to_ptr.hbm [resolvable:$true] %s471
          %474 = dma.vmem_to_hbm [thread:$0]  %s470, 128, %s472, %s443
        $region56: #{tpu_custom_call.1} parent=31 // pred_fallthru
          _
      $region32: #{tpu_custom_call.1} parent=5 // pred_fallthru
        _
      %p475 = scmp.le.s32.totalorder 2, %s23
      // Predicated region
      $region57: #{tpu_custom_call.1} parent=5 // pred_check
        %p476 = pneg %p475
      $region58: #{tpu_custom_call.1} parent=5 // pred_check_branch
        %478 = sbr.rel (%p476) target = $region60
      $region59: #{tpu_custom_call.1} parent=5 // pred_region
        %s479 = ssub.s32 %s23, 2
        // Predicated region
        $region61: #{tpu_custom_call.1} parent=59 // pred_check
          %p480 = pneg %p148
        $region62: #{tpu_custom_call.1} parent=59 // pred_check_branch
          %482 = sbr.rel (%p480) target = $region64
        $region63: #{tpu_custom_call.1} parent=59 // pred_region
          %s483 = sand.u32 %s133, 1
          %s484 = scalar_lea.sflag [#allocation5], %s483
          %s485 = sand.u32 %s133, 1
          %s486 = smul.addr %s485, 8
          %s487 = scalar_lea.vmem [#allocation9], %s486
          %489 = dma.done %s484, 128
        $region64: #{tpu_custom_call.1} parent=59 // pred_fallthru
          _
        // Predicated region
        $region65: #{tpu_custom_call.1} parent=59 // pred_check
          %p490 = pneg %p174
        $region66: #{tpu_custom_call.1} parent=59 // pred_check_branch
          %492 = sbr.rel (%p490) target = $region68
        $region67: #{tpu_custom_call.1} parent=59 // pred_region
          %s493 = sand.u32 %s159, 1
          %s494 = scalar_lea.sflag [#allocation11], %s493
          %s495 = sand.u32 %s159, 1
          %s496 = smul.addr %s495, 8
          %s497 = scalar_lea.vmem [#allocation10], %s496
          %499 = dma.done %s494, 128
        $region68: #{tpu_custom_call.1} parent=59 // pred_fallthru
          _
      $region60: #{tpu_custom_call.1} parent=5 // pred_fallthru
        _
    $region6: #{tpu_custom_call.1} parent=1 // loop_footer
      %s27 = sadd.s32 1, %s23
    $region7: #{tpu_custom_call.1} parent=1 // loop_footer_branch
      %22 = sbr.rel target = $region3
    $region8: #{tpu_custom_call.1} parent=1 // loop_exit
      _
    %500 = vsyncpa [#allocation4], 1
    %s501 = scalar_lea.sflag [#allocation4], 1
    %502 = vsyncpa %s501, 1
    %503 = vsyncpa [#allocation7], 1
    %s504 = scalar_lea.sflag [#allocation7], 1
    %505 = vsyncpa %s504, 1
    %506 = vsyncpa [#allocation5], 1
    %s507 = scalar_lea.sflag [#allocation5], 1
    %508 = vsyncpa %s507, 1
    %509 = vsyncpa [#allocation11], 1
    %s510 = scalar_lea.sflag [#allocation11], 1
    %511 = vsyncpa %s510, 1

</llo_original>
